<compile_context>
chip_gen: v5e
topology: v5e:2x2
jax: 0.10.0
libtpu: 0.0.40
codegen_flags: <defaults>
</compile_context>

<pallas_src>
import functools

import jax
import jax.numpy as jnp
from jax.experimental import pallas as pl
from jax.experimental.pallas import tpu as pltpu


def _round_up(v, m):
    return (v + m - 1) // m * m


# ---------------------------------------------------------------------------
# Fused kernel: per-point MLP + max pool over N + FC head (+identity).
# ---------------------------------------------------------------------------
def _tnet_kernel(x_ref, w1_ref, b1_ref, w2_ref, b2_ref, w3_ref, b3_ref,
                 wf1_ref, bf1_ref, wf2_ref, bf2_ref, wf3_ref, bf3_ref,
                 out_ref, pooled_acc, *, n_valid):
    n = pl.program_id(1)
    n_last = pl.num_programs(1) - 1

    @pl.when(n == 0)
    def _():
        pooled_acc[...] = jnp.full(pooled_acc.shape, -jnp.inf,
                                   dtype=pooled_acc.dtype)

    tb, tn, cin = x_ref.shape
    rows = x_ref[...].reshape(tb * tn, cin)            # (TB*TN, Cin_pad)
    cdt = rows.dtype

    # conv_1..3 (kernel_size=1) with BN folded, ReLU.
    h = jnp.dot(rows, w1_ref[...], preferred_element_type=jnp.float32) + b1_ref[...]
    h = jnp.maximum(h, 0.0).astype(cdt)                # (TB*TN, 64)
    h = jnp.dot(h, w2_ref[...], preferred_element_type=jnp.float32) + b2_ref[...]
    h = jnp.maximum(h, 0.0).astype(cdt)                # (TB*TN, 128)
    h = jnp.dot(h, w3_ref[...], preferred_element_type=jnp.float32) + b3_ref[...]
    h = jnp.maximum(h, 0.0)                            # (TB*TN, 256), f32

    h = h.reshape(tb, tn, h.shape[-1])
    if n_valid is not None:
        # Point axis was padded: mask padded rows so they never win the max.
        row_idx = n * tn + jax.lax.broadcasted_iota(jnp.int32, (1, tn, 1), 1)
        h = jnp.where(row_idx < n_valid, h, -jnp.inf)
    pooled_acc[...] = jnp.maximum(pooled_acc[...], jnp.max(h, axis=1))  # (TB, 256)

    # FC head on the fully-reduced pooled rows (fc_3 bias already contains the
    # flattened identity matrix).
    @pl.when(n == n_last)
    def _():
        f = jnp.dot(pooled_acc[...], wf1_ref[...],
                    preferred_element_type=jnp.float32) + bf1_ref[...]
        f = jnp.maximum(f, 0.0)                        # (TB, 256)
        f = jnp.dot(f, wf2_ref[...], preferred_element_type=jnp.float32) + bf2_ref[...]
        f = jnp.maximum(f, 0.0)                        # (TB, 128)
        out_ref[...] = jnp.dot(f, wf3_ref[...],
                               preferred_element_type=jnp.float32) + bf3_ref[...]


def transformation_net_forward(x, params, output_dim, *, compute_dtype=jnp.bfloat16):
    """x: (B, N, input_dim) float32. Returns (B, output_dim, output_dim) f32."""
    B, N, Cin = x.shape
    KK = output_dim * output_dim
    (w1, b1, w2, b2, w3, b3, wf1, bf1, wf2, bf2, wf3, bf3) = params

    # ---- tiling: ~2K rows per step (good MXU M, small VMEM footprint, fits
    #      comfortably inside v7x's tighter 64 MiB VMEM) -----------------------
    ROWS_TARGET = 2048
    if N <= ROWS_TARGET:
        TN = _round_up(N, 8)
        N_pad = TN
    else:
        TN = ROWS_TARGET
        N_pad = _round_up(N, TN)
    n_tiles = N_pad // TN

    tb_raw = max(1, ROWS_TARGET // TN)
    if tb_raw >= B:
        TB, B_pad = B, B
    else:
        TB = max(8, (tb_raw // 8) * 8)
        B_pad = _round_up(B, TB)
    b_tiles = B_pad // TB

    CIN_PAD = _round_up(max(Cin, 8), 8)      # avoid a 4-wide lane dim for x

    # ---- pad & cast inputs / point-wise weights ------------------------------
    xp = jnp.pad(x, ((0, B_pad - B), (0, N_pad - N), (0, CIN_PAD - Cin)))
    xp = xp.astype(compute_dtype)
    w1p = jnp.pad(w1, ((0, CIN_PAD - Cin), (0, 0))).astype(compute_dtype)
    w2c = w2.astype(compute_dtype)
    w3c = w3.astype(compute_dtype)

    # ---- FC head weights: fold identity into fc_3 bias, pad output to 128 ----
    KK_PAD = _round_up(KK, 128)
    eye_flat = jnp.eye(output_dim, dtype=jnp.float32).reshape(1, KK)
    bf3_eff = jnp.pad(bf3 + eye_flat, ((0, 0), (0, KK_PAD - KK)))
    wf3p = jnp.pad(wf3, ((0, 0), (0, KK_PAD - KK)))

    kernel = functools.partial(_tnet_kernel,
                               n_valid=(N if N_pad != N else None))

    full = lambda a: pl.BlockSpec(a.shape, lambda b, n: (0,) * a.ndim)
    head = pl.pallas_call(
        kernel,
        out_shape=jax.ShapeDtypeStruct((B_pad, KK_PAD), jnp.float32),
        grid=(b_tiles, n_tiles),
        in_specs=[
            pl.BlockSpec((TB, TN, CIN_PAD), lambda b, n: (b, n, 0)),
            full(w1p), full(b1), full(w2c), full(b2), full(w3c), full(b3),
            full(wf1), full(bf1), full(wf2), full(bf2), full(wf3p), full(bf3_eff),
        ],
        out_specs=pl.BlockSpec((TB, KK_PAD), lambda b, n: (b, 0)),
        scratch_shapes=[pltpu.VMEM((TB, 256), jnp.float32)],
        compiler_params=pltpu.CompilerParams(
            dimension_semantics=("parallel", "arbitrary")),
    )(xp, w1p, b1, w2c, b2, w3c, b3, wf1, bf1, wf2, bf2, wf3p, bf3_eff)

    return head[:B, :KK].reshape(B, output_dim, output_dim)


# ---------------------------------------------------------------------------
# Parameter construction (BN folded) and pure-JAX reference
# ---------------------------------------------------------------------------
def _fold_bn(w, b, gamma, beta, mean, var, eps=1e-5):
    """Fold eval-mode BatchNorm into a (in, out) weight and (1, out) bias."""
    scale = gamma / jnp.sqrt(var + eps)
    w_eff = w * scale[None, :]
    b_eff = (b - mean) * scale + beta
    return w_eff.astype(jnp.float32), b_eff.reshape(1, -1).astype(jnp.float32)


def init_params(key, input_dim, output_dim):
    """Deterministic synthetic parameters mirroring the PyTorch module shapes."""
    dims = [(input_dim, 64), (64, 128), (128, 256),      # conv_1..3 (k=1)
            (256, 256), (256, 128),                       # fc_1, fc_2
            (128, output_dim * output_dim)]               # fc_3
    keys = jax.random.split(key, 64)
    ki = iter(range(64))

    raw = []
    for (fan_in, fan_out) in dims:
        bound = 1.0 / jnp.sqrt(fan_in)
        w = jax.random.uniform(keys[next(ki)], (fan_in, fan_out),
                               minval=-bound, maxval=bound, dtype=jnp.float32)
        b = jax.random.uniform(keys[next(ki)], (fan_out,),
                               minval=-bound, maxval=bound, dtype=jnp.float32)
        raw.append((w, b))

    def bn_params(c):
        gamma = jax.random.uniform(keys[next(ki)], (c,), minval=0.5, maxval=1.5)
        beta = jax.random.uniform(keys[next(ki)], (c,), minval=-0.1, maxval=0.1)
        mean = jax.random.uniform(keys[next(ki)], (c,), minval=-0.1, maxval=0.1)
        var = jax.random.uniform(keys[next(ki)], (c,), minval=0.5, maxval=1.5)
        return gamma, beta, mean, var

    bn = [bn_params(64), bn_params(128), bn_params(256),  # bn_1..3
          bn_params(256), bn_params(128)]                 # bn_4, bn_5

    folded = []
    for i in range(5):  # conv_1..3, fc_1, fc_2 (each followed by a BN)
        w, b = raw[i]
        g, bt, m, v = bn[i]
        folded.extend(_fold_bn(w, b, g, bt, m, v))
    # fc_3: no BN
    w3, b3 = raw[5]
    folded.extend([w3, b3.reshape(1, -1)])
    return tuple(folded)


def reference_forward(x, params, output_dim):
    """Pure-JAX f32 reference of the same math (BN already folded into params)."""
    (w1, b1, w2, b2, w3, b3, wf1, bf1, wf2, bf2, wf3, bf3) = params
    h = jax.nn.relu(jnp.einsum('bnc,cd->bnd', x, w1) + b1)
    h = jax.nn.relu(jnp.einsum('bnc,cd->bnd', h, w2) + b2)
    h = jax.nn.relu(jnp.einsum('bnc,cd->bnd', h, w3) + b3)
    pooled = jnp.max(h, axis=1)                                  # (B, 256)
    f = jax.nn.relu(pooled @ wf1 + bf1)
    f = jax.nn.relu(f @ wf2 + bf2)
    f = f @ wf3 + bf3
    B = x.shape[0]
    return f.reshape(B, output_dim, output_dim) + jnp.eye(output_dim, dtype=jnp.float32)


if __name__ == "__main__":
    B, N, INPUT_DIM, OUTPUT_DIM = 2, 16, 4, 4

    key = jax.random.PRNGKey(0)
    k_x, k_p = jax.random.split(key)
    x = jax.random.normal(k_x, (B, N, INPUT_DIM), dtype=jnp.float32)
    params = init_params(k_p, INPUT_DIM, OUTPUT_DIM)

    ref = reference_forward(x, params, OUTPUT_DIM)

    # Exact-precision path (f32 matmul inputs) — tight tolerance.
    out_f32 = transformation_net_forward(x, params, OUTPUT_DIM,
                                         compute_dtype=jnp.float32)
    out_f32 = jax.block_until_ready(out_f32)
    assert out_f32.shape == (B, OUTPUT_DIM, OUTPUT_DIM), out_f32.shape
    assert jnp.allclose(out_f32, ref, rtol=1e-4, atol=1e-4), "f32 mismatch vs reference"

    # bf16 matmul-input path (f32 accumulation, f32 FC head) — loose tolerance.
    out_bf16 = transformation_net_forward(x, params, OUTPUT_DIM,
                                          compute_dtype=jnp.bfloat16)
    out_bf16 = jax.block_until_ready(out_bf16)
    assert jnp.allclose(out_bf16, ref, rtol=3e-2, atol=3e-2), "bf16 mismatch vs reference"

    print("KERNEL_OK")
</pallas_src>

<mosaic_0001>
module attributes {stable_mosaic.version = 11 : i64} {
  func.func @_tnet_kernel(%arg0: i32, %arg1: i32, %arg2: memref<2x16x8xf32, #tpu.memory_space<vmem>>, %arg3: memref<8x64xf32, #tpu.memory_space<vmem>>, %arg4: memref<1x64xf32, #tpu.memory_space<vmem>>, %arg5: memref<64x128xf32, #tpu.memory_space<vmem>>, %arg6: memref<1x128xf32, #tpu.memory_space<vmem>>, %arg7: memref<128x256xf32, #tpu.memory_space<vmem>>, %arg8: memref<1x256xf32, #tpu.memory_space<vmem>>, %arg9: memref<256x256xf32, #tpu.memory_space<vmem>>, %arg10: memref<1x256xf32, #tpu.memory_space<vmem>>, %arg11: memref<256x128xf32, #tpu.memory_space<vmem>>, %arg12: memref<1x128xf32, #tpu.memory_space<vmem>>, %arg13: memref<128x128xf32, #tpu.memory_space<vmem>>, %arg14: memref<1x128xf32, #tpu.memory_space<vmem>>, %arg15: memref<2x128xf32, #tpu.memory_space<vmem>>, %arg16: memref<2x256xf32, #tpu.memory_space<vmem>>) attributes {dimension_semantics = [#tpu.dimension_semantics<parallel>, #tpu.dimension_semantics<arbitrary>], iteration_bounds = array<i64: 1, 1>, scalar_prefetch = 0 : i64, scratch_operands = 1 : i64, tpu.core_type = #tpu.core_type<tc>, window_params = [{transform_indices = @transform_0, window_bounds = array<i64: 2, 16, 8>}, {pipeline_mode = #tpu.pipeline_mode<synchronous>, transform_indices = @transform_1, window_bounds = array<i64: 8, 64>}, {pipeline_mode = #tpu.pipeline_mode<synchronous>, transform_indices = @transform_2, window_bounds = array<i64: 1, 64>}, {pipeline_mode = #tpu.pipeline_mode<synchronous>, transform_indices = @transform_3, window_bounds = array<i64: 64, 128>}, {pipeline_mode = #tpu.pipeline_mode<synchronous>, transform_indices = @transform_4, window_bounds = array<i64: 1, 128>}, {pipeline_mode = #tpu.pipeline_mode<synchronous>, transform_indices = @transform_5, window_bounds = array<i64: 128, 256>}, {pipeline_mode = #tpu.pipeline_mode<synchronous>, transform_indices = @transform_6, window_bounds = array<i64: 1, 256>}, {pipeline_mode = #tpu.pipeline_mode<synchronous>, transform_indices = @transform_7, window_bounds = array<i64: 256, 256>}, {pipeline_mode = #tpu.pipeline_mode<synchronous>, transform_indices = @transform_8, window_bounds = array<i64: 1, 256>}, {pipeline_mode = #tpu.pipeline_mode<synchronous>, transform_indices = @transform_9, window_bounds = array<i64: 256, 128>}, {pipeline_mode = #tpu.pipeline_mode<synchronous>, transform_indices = @transform_10, window_bounds = array<i64: 1, 128>}, {pipeline_mode = #tpu.pipeline_mode<synchronous>, transform_indices = @transform_11, window_bounds = array<i64: 128, 128>}, {pipeline_mode = #tpu.pipeline_mode<synchronous>, transform_indices = @transform_12, window_bounds = array<i64: 1, 128>}, {transform_indices = @transform_13, window_bounds = array<i64: 2, 128>}]} {
    %c0_i32 = arith.constant 0 : i32
    %0 = arith.cmpi eq, %arg1, %c0_i32 : i32
    %1 = arith.extui %0 : i1 to i32
    %c0_i32_0 = arith.constant 0 : i32
    %2 = arith.cmpi ne, %1, %c0_i32_0 : i32
    scf.if %2 {
      %cst_27 = arith.constant 0xFF800000 : f32
      %34 = vector.broadcast %cst_27 : f32 to vector<2x256xf32>
      %c0_28 = arith.constant 0 : index
      %c0_29 = arith.constant 0 : index
      %35 = vector.load %arg16[%c0_28, %c0_29] : memref<2x256xf32, #tpu.memory_space<vmem>>, vector<2x256xf32>
      tpu.vector_store %arg16[%c0_28, %c0_29], %34 {strides = array<i32>} : memref<2x256xf32, #tpu.memory_space<vmem>>, vector<2x256xf32>,
    } else {
    }
    %c0 = arith.constant 0 : index
    %c0_1 = arith.constant 0 : index
    %c0_2 = arith.constant 0 : index
    %3 = vector.load %arg2[%c0, %c0_1, %c0_2] : memref<2x16x8xf32, #tpu.memory_space<vmem>>, vector<2x16x8xf32>
    %4 = vector.shape_cast %3 : vector<2x16x8xf32> to vector<32x8xf32>
    %c0_3 = arith.constant 0 : index
    %c0_4 = arith.constant 0 : index
    %5 = vector.load %arg3[%c0_3, %c0_4] : memref<8x64xf32, #tpu.memory_space<vmem>>, vector<8x64xf32>
    %cst = arith.constant dense<0.000000e+00> : vector<32x64xf32>
    %6 = tpu.matmul %4, %5, %cst {dimension_numbers = #tpu.dot_dimension_numbers<[1], [0], [0], [1], [0, 0, 1, 1], [], []>} : vector<32x8xf32>, vector<8x64xf32>, vector<32x64xf32> -> vector<32x64xf32>
    %c0_5 = arith.constant 0 : index
    %c0_6 = arith.constant 0 : index
    %7 = vector.load %arg4[%c0_5, %c0_6] : memref<1x64xf32, #tpu.memory_space<vmem>>, vector<1x64xf32>
    %8 = vector.broadcast %7 : vector<1x64xf32> to vector<32x64xf32>
    %9 = arith.addf %6, %8 : vector<32x64xf32>
    %cst_7 = arith.constant 0.000000e+00 : f32
    %10 = vector.broadcast %cst_7 : f32 to vector<32x64xf32>
    %11 = arith.maximumf %9, %10 : vector<32x64xf32>
    %c0_8 = arith.constant 0 : index
    %c0_9 = arith.constant 0 : index
    %12 = vector.load %arg5[%c0_8, %c0_9] : memref<64x128xf32, #tpu.memory_space<vmem>>, vector<64x128xf32>
    %cst_10 = arith.constant dense<0.000000e+00> : vector<32x128xf32>
    %13 = tpu.matmul %11, %12, %cst_10 {dimension_numbers = #tpu.dot_dimension_numbers<[1], [0], [0], [1], [0, 0, 1, 1], [], []>} : vector<32x64xf32>, vector<64x128xf32>, vector<32x128xf32> -> vector<32x128xf32>
    %c0_11 = arith.constant 0 : index
    %c0_12 = arith.constant 0 : index
    %14 = vector.load %arg6[%c0_11, %c0_12] : memref<1x128xf32, #tpu.memory_space<vmem>>, vector<1x128xf32>
    %15 = vector.broadcast %14 : vector<1x128xf32> to vector<32x128xf32>
    %16 = arith.addf %13, %15 : vector<32x128xf32>
    %cst_13 = arith.constant 0.000000e+00 : f32
    %17 = vector.broadcast %cst_13 : f32 to vector<32x128xf32>
    %18 = arith.maximumf %16, %17 : vector<32x128xf32>
    %c0_14 = arith.constant 0 : index
    %c0_15 = arith.constant 0 : index
    %19 = vector.load %arg7[%c0_14, %c0_15] : memref<128x256xf32, #tpu.memory_space<vmem>>, vector<128x256xf32>
    %cst_16 = arith.constant dense<0.000000e+00> : vector<32x256xf32>
    %20 = tpu.matmul %18, %19, %cst_16 {dimension_numbers = #tpu.dot_dimension_numbers<[1], [0], [0], [1], [0, 0, 1, 1], [], []>} : vector<32x128xf32>, vector<128x256xf32>, vector<32x256xf32> -> vector<32x256xf32>
    %c0_17 = arith.constant 0 : index
    %c0_18 = arith.constant 0 : index
    %21 = vector.load %arg8[%c0_17, %c0_18] : memref<1x256xf32, #tpu.memory_space<vmem>>, vector<1x256xf32>
    %22 = vector.broadcast %21 : vector<1x256xf32> to vector<32x256xf32>
    %23 = arith.addf %20, %22 : vector<32x256xf32>
    %cst_19 = arith.constant 0.000000e+00 : f32
    %24 = vector.broadcast %cst_19 : f32 to vector<32x256xf32>
    %25 = arith.maximumf %23, %24 : vector<32x256xf32>
    %26 = vector.shape_cast %25 : vector<32x256xf32> to vector<2x16x256xf32>
    %c0_20 = arith.constant 0 : index
    %c0_21 = arith.constant 0 : index
    %27 = vector.load %arg16[%c0_20, %c0_21] : memref<2x256xf32, #tpu.memory_space<vmem>>, vector<2x256xf32>
    %cst_22 = arith.constant dense<0xFF800000> : vector<2x256xf32>
    %28 = vector.multi_reduction <maximumf>, %26, %cst_22 [1] : vector<2x16x256xf32> to vector<2x256xf32>
    %29 = arith.maximumf %27, %28 : vector<2x256xf32>
    %c0_23 = arith.constant 0 : index
    %c0_24 = arith.constant 0 : index
    %30 = vector.load %arg16[%c0_23, %c0_24] : memref<2x256xf32, #tpu.memory_space<vmem>>, vector<2x256xf32>
    tpu.vector_store %arg16[%c0_23, %c0_24], %29 {strides = array<i32>} : memref<2x256xf32, #tpu.memory_space<vmem>>, vector<2x256xf32>,
    %c0_i32_25 = arith.constant 0 : i32
    %31 = arith.cmpi eq, %arg1, %c0_i32_25 : i32
    %32 = arith.extui %31 : i1 to i32
    %c0_i32_26 = arith.constant 0 : i32
    %33 = arith.cmpi ne, %32, %c0_i32_26 : i32
    scf.if %33 {
      %c0_27 = arith.constant 0 : index
      %c0_28 = arith.constant 0 : index
      %34 = vector.load %arg16[%c0_27, %c0_28] : memref<2x256xf32, #tpu.memory_space<vmem>>, vector<2x256xf32>
      %c0_29 = arith.constant 0 : index
      %c0_30 = arith.constant 0 : index
      %35 = vector.load %arg9[%c0_29, %c0_30] : memref<256x256xf32, #tpu.memory_space<vmem>>, vector<256x256xf32>
      %cst_31 = arith.constant dense<0.000000e+00> : vector<2x256xf32>
      %36 = tpu.matmul %34, %35, %cst_31 {dimension_numbers = #tpu.dot_dimension_numbers<[1], [0], [0], [1], [0, 0, 1, 1], [], []>} : vector<2x256xf32>, vector<256x256xf32>, vector<2x256xf32> -> vector<2x256xf32>
      %c0_32 = arith.constant 0 : index
      %c0_33 = arith.constant 0 : index
      %37 = vector.load %arg10[%c0_32, %c0_33] : memref<1x256xf32, #tpu.memory_space<vmem>>, vector<1x256xf32>
      %38 = vector.broadcast %37 : vector<1x256xf32> to vector<2x256xf32>
      %39 = arith.addf %36, %38 : vector<2x256xf32>
      %cst_34 = arith.constant 0.000000e+00 : f32
      %40 = vector.broadcast %cst_34 : f32 to vector<2x256xf32>
      %41 = arith.maximumf %39, %40 : vector<2x256xf32>
      %c0_35 = arith.constant 0 : index
      %c0_36 = arith.constant 0 : index
      %42 = vector.load %arg11[%c0_35, %c0_36] : memref<256x128xf32, #tpu.memory_space<vmem>>, vector<256x128xf32>
      %cst_37 = arith.constant dense<0.000000e+00> : vector<2x128xf32>
      %43 = tpu.matmul %41, %42, %cst_37 {dimension_numbers = #tpu.dot_dimension_numbers<[1], [0], [0], [1], [0, 0, 1, 1], [], []>} : vector<2x256xf32>, vector<256x128xf32>, vector<2x128xf32> -> vector<2x128xf32>
      %c0_38 = arith.constant 0 : index
      %c0_39 = arith.constant 0 : index
      %44 = vector.load %arg12[%c0_38, %c0_39] : memref<1x128xf32, #tpu.memory_space<vmem>>, vector<1x128xf32>
      %45 = vector.broadcast %44 : vector<1x128xf32> to vector<2x128xf32>
      %46 = arith.addf %43, %45 : vector<2x128xf32>
      %cst_40 = arith.constant 0.000000e+00 : f32
      %47 = vector.broadcast %cst_40 : f32 to vector<2x128xf32>
      %48 = arith.maximumf %46, %47 : vector<2x128xf32>
      %c0_41 = arith.constant 0 : index
      %c0_42 = arith.constant 0 : index
      %49 = vector.load %arg13[%c0_41, %c0_42] : memref<128x128xf32, #tpu.memory_space<vmem>>, vector<128x128xf32>
      %cst_43 = arith.constant dense<0.000000e+00> : vector<2x128xf32>
      %50 = tpu.matmul %48, %49, %cst_43 {dimension_numbers = #tpu.dot_dimension_numbers<[1], [0], [0], [1], [0, 0, 1, 1], [], []>} : vector<2x128xf32>, vector<128x128xf32>, vector<2x128xf32> -> vector<2x128xf32>
      %c0_44 = arith.constant 0 : index
      %c0_45 = arith.constant 0 : index
      %51 = vector.load %arg14[%c0_44, %c0_45] : memref<1x128xf32, #tpu.memory_space<vmem>>, vector<1x128xf32>
      %52 = vector.broadcast %51 : vector<1x128xf32> to vector<2x128xf32>
      %53 = arith.addf %50, %52 : vector<2x128xf32>
      %c0_46 = arith.constant 0 : index
      %c0_47 = arith.constant 0 : index
      %54 = vector.load %arg15[%c0_46, %c0_47] : memref<2x128xf32, #tpu.memory_space<vmem>>, vector<2x128xf32>
      tpu.vector_store %arg15[%c0_46, %c0_47], %53 {strides = array<i32>} : memref<2x128xf32, #tpu.memory_space<vmem>>, vector<2x128xf32>,
    } else {
    }
    return
  }
  func.func @transform_0(%arg0: i32, %arg1: i32) -> (i32, i32, i32) {
    %c0_i32 = arith.constant 0 : i32
    %c0_i32_0 = arith.constant 0 : i32
    return %arg0, %arg1, %c0_i32 : i32, i32, i32
  }
  func.func @transform_1(%arg0: i32, %arg1: i32) -> (i32, i32) {
    %c0_i32 = arith.constant 0 : i32
    %c0_i32_0 = arith.constant 0 : i32
    %c0_i32_1 = arith.constant 0 : i32
    return %c0_i32, %c0_i32_0 : i32, i32
  }
  func.func @transform_2(%arg0: i32, %arg1: i32) -> (i32, i32) {
    %c0_i32 = arith.constant 0 : i32
    %c0_i32_0 = arith.constant 0 : i32
    %c0_i32_1 = arith.constant 0 : i32
    return %c0_i32, %c0_i32_0 : i32, i32
  }
  func.func @transform_3(%arg0: i32, %arg1: i32) -> (i32, i32) {
    %c0_i32 = arith.constant 0 : i32
    %c0_i32_0 = arith.constant 0 : i32
    %c0_i32_1 = arith.constant 0 : i32
    return %c0_i32, %c0_i32_0 : i32, i32
  }
  func.func @transform_4(%arg0: i32, %arg1: i32) -> (i32, i32) {
    %c0_i32 = arith.constant 0 : i32
    %c0_i32_0 = arith.constant 0 : i32
    %c0_i32_1 = arith.constant 0 : i32
    return %c0_i32, %c0_i32_0 : i32, i32
  }
  func.func @transform_5(%arg0: i32, %arg1: i32) -> (i32, i32) {
    %c0_i32 = arith.constant 0 : i32
    %c0_i32_0 = arith.constant 0 : i32
    %c0_i32_1 = arith.constant 0 : i32
    return %c0_i32, %c0_i32_0 : i32, i32
  }
  func.func @transform_6(%arg0: i32, %arg1: i32) -> (i32, i32) {
    %c0_i32 = arith.constant 0 : i32
    %c0_i32_0 = arith.constant 0 : i32
    %c0_i32_1 = arith.constant 0 : i32
    return %c0_i32, %c0_i32_0 : i32, i32
  }
  func.func @transform_7(%arg0: i32, %arg1: i32) -> (i32, i32) {
    %c0_i32 = arith.constant 0 : i32
    %c0_i32_0 = arith.constant 0 : i32
    %c0_i32_1 = arith.constant 0 : i32
    return %c0_i32, %c0_i32_0 : i32, i32
  }
  func.func @transform_8(%arg0: i32, %arg1: i32) -> (i32, i32) {
    %c0_i32 = arith.constant 0 : i32
    %c0_i32_0 = arith.constant 0 : i32
    %c0_i32_1 = arith.constant 0 : i32
    return %c0_i32, %c0_i32_0 : i32, i32
  }
  func.func @transform_9(%arg0: i32, %arg1: i32) -> (i32, i32) {
    %c0_i32 = arith.constant 0 : i32
    %c0_i32_0 = arith.constant 0 : i32
    %c0_i32_1 = arith.constant 0 : i32
    return %c0_i32, %c0_i32_0 : i32, i32
  }
  func.func @transform_10(%arg0: i32, %arg1: i32) -> (i32, i32) {
    %c0_i32 = arith.constant 0 : i32
    %c0_i32_0 = arith.constant 0 : i32
    %c0_i32_1 = arith.constant 0 : i32
    return %c0_i32, %c0_i32_0 : i32, i32
  }
  func.func @transform_11(%arg0: i32, %arg1: i32) -> (i32, i32) {
    %c0_i32 = arith.constant 0 : i32
    %c0_i32_0 = arith.constant 0 : i32
    %c0_i32_1 = arith.constant 0 : i32
    return %c0_i32, %c0_i32_0 : i32, i32
  }
  func.func @transform_12(%arg0: i32, %arg1: i32) -> (i32, i32) {
    %c0_i32 = arith.constant 0 : i32
    %c0_i32_0 = arith.constant 0 : i32
    %c0_i32_1 = arith.constant 0 : i32
    return %c0_i32, %c0_i32_0 : i32, i32
  }
  func.func @transform_13(%arg0: i32, %arg1: i32) -> (i32, i32) {
    %c0_i32 = arith.constant 0 : i32
    %c0_i32_0 = arith.constant 0 : i32
    return %arg0, %c0_i32 : i32, i32
  }
}

</mosaic_0001>

<llo_original>
// kernel: tpu_custom_call.1
$region0: #{tpu_custom_call.1}
  #allocation0 [shape = 'u32[]', space=smem, size = 0x4, offset = 0x4, fixed_abs, tag = 'smem constant byte address 0x4 - core index']
  #allocation1 [shape = 'u32[72,128]{1,0:T(1,128)}', space=vmem, size = 0x9000, scoped, tag = 'internal scratch']
  #allocation2 [shape = 'f32[2,256]{1,0:T(2,128)}', space=vmem, size = 0x800, scoped, tag = 'scratch operand']
  %s0 = inlined_call_operand.vmem [shape: f32[2,16,8], index: 0, kind: input, shape index: {}]
  %s1 = inlined_call_operand.vmem [shape: f32[8,64], index: 1, kind: input, shape index: {}]
  %s2 = inlined_call_operand.vmem [shape: f32[1,64], index: 2, kind: input, shape index: {}]
  %s3 = inlined_call_operand.hbm [shape: f32[64,128], index: 3, kind: input, shape index: {}]
  %s4 = inlined_call_operand.vmem [shape: f32[1,128], index: 4, kind: input, shape index: {}]
  %s5 = inlined_call_operand.hbm [shape: f32[128,256], index: 5, kind: input, shape index: {}]
  %s6 = inlined_call_operand.vmem [shape: f32[1,256], index: 6, kind: input, shape index: {}]
  %s7 = inlined_call_operand.hbm [shape: f32[256,256], index: 7, kind: input, shape index: {}]
  %s8 = inlined_call_operand.vmem [shape: f32[1,256], index: 8, kind: input, shape index: {}]
  %s9 = inlined_call_operand.hbm [shape: f32[256,128], index: 9, kind: input, shape index: {}]
  %s10 = inlined_call_operand.vmem [shape: f32[1,128], index: 10, kind: input, shape index: {}]
  %s11 = inlined_call_operand.hbm [shape: f32[128,128], index: 11, kind: input, shape index: {}]
  %s12 = inlined_call_operand.vmem [shape: f32[1,128], index: 12, kind: input, shape index: {}]
  %s13 = inlined_call_operand.hbm [shape: f32[2,128], index: 13, kind: output, shape index: {}]
  %s14 = sld [smem:[#allocation0]]
  $region90: #{tpu_custom_call.1} parent=0
    _
  %s16 = ssub.s32 1, %s14
  %s17 = scalar_select 0, %s16, %s14
  $region1: #{tpu_custom_call.1} parent=0
    #allocation3 [shape = 'u8[32768]{0}', space=vmem, size = 0x8000, scoped, tag = 'input window, operand 3, single buffered']
    #allocation4 [shape = 's32[1]{0}', space=sflag, size = 0x4, scoped, tag = 'scoped memory for tpu_custom_call.1']
    #allocation5 [shape = 's32[1]{0}', space=sflag, size = 0x4, scoped, tag = 'scoped memory for tpu_custom_call.1']
    #allocation6 [shape = 'u8[131072]{0}', space=vmem, size = 0x20000, scoped, tag = 'input window, operand 5, single buffered']
    #allocation7 [shape = 's32[1]{0}', space=sflag, size = 0x4, scoped, tag = 'scoped memory for tpu_custom_call.1']
    #allocation8 [shape = 'u8[262144]{0}', space=vmem, size = 0x40000, scoped, tag = 'input window, operand 7, single buffered']
    #allocation9 [shape = 'u8[131072]{0}', space=vmem, size = 0x20000, scoped, tag = 'input window, operand 9, single buffered']
    #allocation10 [shape = 's32[1]{0}', space=sflag, size = 0x4, scoped, tag = 'scoped memory for tpu_custom_call.1']
    #allocation11 [shape = 'u8[65536]{0}', space=vmem, size = 0x10000, scoped, tag = 'input window, operand 11, single buffered']
    #allocation12 [shape = 'u8[1024]{0}', space=vmem, size = 0x400, scoped, tag = 'output window, operand 0, single buffered']
    %18 = vsyncpa [#allocation4], 0
    %19 = vsyncpa [#allocation7], 0
    %20 = vsyncpa [#allocation10], 0
    %21 = vsyncpa [#allocation5], 0
    // Predicated region
    $region2: #{tpu_custom_call.1} parent=1 // pred_check
      _
    $region3: #{tpu_custom_call.1} parent=1 // pred_check_branch
      %23 = sbr.rel (0) target = $region5
    $region4: #{tpu_custom_call.1} parent=1 // pred_region
      _
    $region5: #{tpu_custom_call.1} parent=1 // pred_fallthru
      _
    // Predicated region
    $region6: #{tpu_custom_call.1} parent=1 // pred_check
      _
    $region7: #{tpu_custom_call.1} parent=1 // pred_check_branch
      %25 = sbr.rel (0) target = $region9
    $region8: #{tpu_custom_call.1} parent=1 // pred_region
      _
    $region9: #{tpu_custom_call.1} parent=1 // pred_fallthru
      _
    // Predicated region
    $region10: #{tpu_custom_call.1} parent=1 // pred_check
      _
    $region11: #{tpu_custom_call.1} parent=1 // pred_check_branch
      %27 = sbr.rel (0) target = $region13
    $region12: #{tpu_custom_call.1} parent=1 // pred_region
      _
    $region13: #{tpu_custom_call.1} parent=1 // pred_fallthru
      _
    // Predicated region
    $region14: #{tpu_custom_call.1} parent=1 // pred_check
      _
    $region15: #{tpu_custom_call.1} parent=1 // pred_check_branch
      %29 = sbr.rel (0) target = $region17
    $region16: #{tpu_custom_call.1} parent=1 // pred_region
      %31 = vsyncadd [#allocation4], 0
      %s32 = sshll.u32 %s3, 4
      %s33 = int_to_ptr.hbm [resolvable:$true] %s32
      %s34 = sshll.u32 [#allocation3], 4
      %s35 = int_to_ptr.vmem [resolvable:$true] %s34
      %40 = dma.hbm_to_vmem [thread:$0]  %s33, 1024, %s35, [#allocation4], 128, 128, 8
    $region17: #{tpu_custom_call.1} parent=1 // pred_fallthru
      _
    // Predicated region
    $region18: #{tpu_custom_call.1} parent=1 // pred_check
      _
    $region19: #{tpu_custom_call.1} parent=1 // pred_check_branch
      %42 = sbr.rel (0) target = $region21
    $region20: #{tpu_custom_call.1} parent=1 // pred_region
      _
    $region21: #{tpu_custom_call.1} parent=1 // pred_fallthru
      _
    // Predicated region
    $region22: #{tpu_custom_call.1} parent=1 // pred_check
      _
    $region23: #{tpu_custom_call.1} parent=1 // pred_check_branch
      %44 = sbr.rel (0) target = $region25
    $region24: #{tpu_custom_call.1} parent=1 // pred_region
      %46 = vsyncadd [#allocation7], 0
      %s47 = sshll.u32 %s5, 4
      %s48 = int_to_ptr.hbm [resolvable:$true] %s47
      %s49 = sshll.u32 [#allocation6], 4
      %s50 = int_to_ptr.vmem [resolvable:$true] %s49
      %55 = dma.hbm_to_vmem [thread:$0]  %s48, 4096, %s50, [#allocation7], 256, 256, 16
    $region25: #{tpu_custom_call.1} parent=1 // pred_fallthru
      _
    // Predicated region
    $region26: #{tpu_custom_call.1} parent=1 // pred_check
      _
    $region27: #{tpu_custom_call.1} parent=1 // pred_check_branch
      %57 = sbr.rel (0) target = $region29
    $region28: #{tpu_custom_call.1} parent=1 // pred_region
      _
    $region29: #{tpu_custom_call.1} parent=1 // pred_fallthru
      _
    // Predicated region
    $region30: #{tpu_custom_call.1} parent=1 // pred_check
      _
    $region31: #{tpu_custom_call.1} parent=1 // pred_check_branch
      %59 = sbr.rel (0) target = $region33
    $region32: #{tpu_custom_call.1} parent=1 // pred_region
      %61 = vsyncadd [#allocation7], 0
      %s62 = sshll.u32 %s7, 4
      %s63 = int_to_ptr.hbm [resolvable:$true] %s62
      %s64 = sshll.u32 [#allocation8], 4
      %s65 = int_to_ptr.vmem [resolvable:$true] %s64
      %70 = dma.hbm_to_vmem [thread:$0]  %s63, 8192, %s65, [#allocation7], 256, 256, 16
    $region33: #{tpu_custom_call.1} parent=1 // pred_fallthru
      _
    // Predicated region
    $region34: #{tpu_custom_call.1} parent=1 // pred_check
      _
    $region35: #{tpu_custom_call.1} parent=1 // pred_check_branch
      %72 = sbr.rel (0) target = $region37
    $region36: #{tpu_custom_call.1} parent=1 // pred_region
      _
    $region37: #{tpu_custom_call.1} parent=1 // pred_fallthru
      _
    // Predicated region
    $region38: #{tpu_custom_call.1} parent=1 // pred_check
      _
    $region39: #{tpu_custom_call.1} parent=1 // pred_check_branch
      %74 = sbr.rel (0) target = $region41
    $region40: #{tpu_custom_call.1} parent=1 // pred_region
      %76 = vsyncadd [#allocation10], 0
      %s77 = sshll.u32 %s9, 4
      %s78 = int_to_ptr.hbm [resolvable:$true] %s77
      %s79 = sshll.u32 [#allocation9], 4
      %s80 = int_to_ptr.vmem [resolvable:$true] %s79
      %85 = dma.hbm_to_vmem [thread:$0]  %s78, 4096, %s80, [#allocation10], 128, 128, 8
    $region41: #{tpu_custom_call.1} parent=1 // pred_fallthru
      _
    // Predicated region
    $region42: #{tpu_custom_call.1} parent=1 // pred_check
      _
    $region43: #{tpu_custom_call.1} parent=1 // pred_check_branch
      %87 = sbr.rel (0) target = $region45
    $region44: #{tpu_custom_call.1} parent=1 // pred_region
      _
    $region45: #{tpu_custom_call.1} parent=1 // pred_fallthru
      _
    // Predicated region
    $region46: #{tpu_custom_call.1} parent=1 // pred_check
      _
    $region47: #{tpu_custom_call.1} parent=1 // pred_check_branch
      %89 = sbr.rel (0) target = $region49
    $region48: #{tpu_custom_call.1} parent=1 // pred_region
      %91 = vsyncadd [#allocation10], 0
      %s92 = sshll.u32 %s11, 4
      %s93 = int_to_ptr.hbm [resolvable:$true] %s92
      %s94 = sshll.u32 [#allocation11], 4
      %s95 = int_to_ptr.vmem [resolvable:$true] %s94
      %100 = dma.hbm_to_vmem [thread:$0]  %s93, 2048, %s95, [#allocation10], 128, 128, 8
    $region49: #{tpu_custom_call.1} parent=1 // pred_fallthru
      _
    // Predicated region
    $region50: #{tpu_custom_call.1} parent=1 // pred_check
      _
    $region51: #{tpu_custom_call.1} parent=1 // pred_check_branch
      %102 = sbr.rel (0) target = $region53
    $region52: #{tpu_custom_call.1} parent=1 // pred_region
      _
    $region53: #{tpu_custom_call.1} parent=1 // pred_fallthru
      _
    // Predicated region
    $region54: #{tpu_custom_call.1} parent=1 // pred_check
      _
    $region55: #{tpu_custom_call.1} parent=1 // pred_check_branch
      %104 = sbr.rel (0) target = $region57
    $region56: #{tpu_custom_call.1} parent=1 // pred_region
      %106 = dma.done [#allocation4], 1024
    $region57: #{tpu_custom_call.1} parent=1 // pred_fallthru
      _
    // Predicated region
    $region58: #{tpu_custom_call.1} parent=1 // pred_check
      _
    $region59: #{tpu_custom_call.1} parent=1 // pred_check_branch
      %108 = sbr.rel (0) target = $region61
    $region60: #{tpu_custom_call.1} parent=1 // pred_region
      %110 = dma.done [#allocation7], 4096
    $region61: #{tpu_custom_call.1} parent=1 // pred_fallthru
      _
    // Predicated region
    $region62: #{tpu_custom_call.1} parent=1 // pred_check
      _
    $region63: #{tpu_custom_call.1} parent=1 // pred_check_branch
      %112 = sbr.rel (0) target = $region65
    $region64: #{tpu_custom_call.1} parent=1 // pred_region
      %114 = dma.done [#allocation7], 8192
    $region65: #{tpu_custom_call.1} parent=1 // pred_fallthru
      _
    // Predicated region
    $region66: #{tpu_custom_call.1} parent=1 // pred_check
      _
    $region67: #{tpu_custom_call.1} parent=1 // pred_check_branch
      %116 = sbr.rel (0) target = $region69
    $region68: #{tpu_custom_call.1} parent=1 // pred_region
      %118 = dma.done [#allocation10], 4096
    $region69: #{tpu_custom_call.1} parent=1 // pred_fallthru
      _
    // Predicated region
    $region70: #{tpu_custom_call.1} parent=1 // pred_check
      _
    $region71: #{tpu_custom_call.1} parent=1 // pred_check_branch
      %120 = sbr.rel (0) target = $region73
    $region72: #{tpu_custom_call.1} parent=1 // pred_region
      %122 = dma.done [#allocation10], 2048
    $region73: #{tpu_custom_call.1} parent=1 // pred_fallthru
      _
    %p123 = scmp.eq.s32.totalorder 0, 0
    // Predicated region
    $region74: #{tpu_custom_call.1} parent=1 // pred_check
      %p124 = pneg %p123
    $region75: #{tpu_custom_call.1} parent=1 // pred_check_branch
      %126 = sbr.rel (%p124) target = $region77
    $region76: #{tpu_custom_call.1} parent=1 // pred_region
      %127 = vst [vmem:[#allocation2] sm:$0xf] -inf
    $region77: #{tpu_custom_call.1} parent=1 // pred_fallthru
      _
    %v128 = vld [vmem:[%s0] sm:$0xff]
    %v129 = vld [vmem:[%s0 + $0x8] sm:$0xff]
    %v130 = vld [vmem:[%s0 + $0x10] sm:$0xff]
    %v131 = vld [vmem:[%s0 + $0x18] sm:$0xff]
    %v132 = vld [vmem:[%s1] sm:$0xff]
    %v133 = vld [vmem:[%s2] sm:$0x1]
    %v135 = vperm.slane %v133, 0
    %vm137 = vcmask 64512
    %v139 = vsel %vm137, %v128, 0
    %v142 = vsel %vm137, %v129, 0
    %v145 = vsel %vm137, %v130, 0
    %v148 = vsel %vm137, %v131, 0
    %150 = vmatpush.msra.mxu0 0.0
    %151 = vmatpush.msra.mxu0 0.0
    %152 = vmatpush.msra.mxu0 0.0
    %153 = vmatpush.msra.mxu0 0.0
    %154 = vmatpush.msra.mxu0 0.0
    %155 = vmatpush.msra.mxu0 0.0
    %156 = vmatpush.msra.mxu0 0.0
    %157 = vmatpush.msra.mxu0 0.0
    %158 = vmatpush.msra.mxu0 0.0
    %159 = vmatpush.msra.mxu0 0.0
    %160 = vmatpush.msra.mxu0 0.0
    %161 = vmatpush.msra.mxu0 0.0
    %162 = vmatpush.msra.mxu0 0.0
    %163 = vmatpush.msra.mxu0 0.0
    %164 = vmatpush.msra.mxu0 0.0
    %165 = vmatpush.msra.mxu0 %v132
    %166 = vmatmul.f32.gmra.mxu0 %v139
    %v167 = vpop.f32.mrf.mxu0
    %v168 = vadd.f32 %v135, %v167
    %169 = vmatmul.f32.gmra.mxu0 %v142
    %v170 = vpop.f32.mrf.mxu0
    %v171 = vadd.f32 %v135, %v170
    %172 = vmatmul.f32.gmra.mxu0 %v145
    %v173 = vpop.f32.mrf.mxu0
    %v174 = vadd.f32 %v135, %v173
    %175 = vmatmul.f32.gmra.mxu0 %v148
    %v176 = vpop.f32.mrf.mxu0
    %v177 = vadd.f32 %v135, %v176
    %178 = vdwg.mxu0
    %v179 = vmax.f32 %v168, 0.0
    %v180 = vmax.f32 %v171, 0.0
    %v181 = vmax.f32 %v174, 0.0
    %v182 = vmax.f32 %v177, 0.0
    %v183 = vld [vmem:[#allocation3] sm:$0xff]
    %v184 = vld [vmem:[#allocation3 + $0x8] sm:$0xff]
    %v185 = vld [vmem:[#allocation3 + $0x10] sm:$0xff]
    %v186 = vld [vmem:[#allocation3 + $0x18] sm:$0xff]
    %v187 = vld [vmem:[#allocation3 + $0x20] sm:$0xff]
    %v188 = vld [vmem:[#allocation3 + $0x28] sm:$0xff]
    %v189 = vld [vmem:[#allocation3 + $0x30] sm:$0xff]
    %v190 = vld [vmem:[#allocation3 + $0x38] sm:$0xff]
    %v191 = vld [vmem:[%s4] sm:$0x1]
    %v193 = vperm.slane %v191, 0
    %vm195 = vcmask 523264
    %v197 = vsel %vm195, %v179, 0
    %v200 = vsel %vm195, %v180, 0
    %v203 = vsel %vm195, %v181, 0
    %v206 = vsel %vm195, %v182, 0
    %208 = vmatpush.msra.mxu0 0.0
    %209 = vmatpush.msra.mxu0 0.0
    %210 = vmatpush.msra.mxu0 0.0
    %211 = vmatpush.msra.mxu0 0.0
    %212 = vmatpush.msra.mxu0 0.0
    %213 = vmatpush.msra.mxu0 0.0
    %214 = vmatpush.msra.mxu0 0.0
    %215 = vmatpush.msra.mxu0 0.0
    %216 = vmatpush.msra.mxu0 %v190
    %217 = vmatpush.msra.mxu0 %v189
    %218 = vmatpush.msra.mxu0 %v188
    %219 = vmatpush.msra.mxu0 %v187
    %220 = vmatpush.msra.mxu0 %v186
    %221 = vmatpush.msra.mxu0 %v185
    %222 = vmatpush.msra.mxu0 %v184
    %223 = vmatpush.msra.mxu0 %v183
    %224 = vmatmul.f32.gmra.mxu0 %v197
    %v225 = vpop.f32.mrf.mxu0
    %v226 = vadd.f32 %v193, %v225
    %227 = vmatmul.f32.gmra.mxu0 %v200
    %v228 = vpop.f32.mrf.mxu0
    %v229 = vadd.f32 %v193, %v228
    %230 = vmatmul.f32.gmra.mxu0 %v203
    %v231 = vpop.f32.mrf.mxu0
    %v232 = vadd.f32 %v193, %v231
    %233 = vmatmul.f32.gmra.mxu0 %v206
    %v234 = vpop.f32.mrf.mxu0
    %v235 = vadd.f32 %v193, %v234
    %236 = vdwg.mxu0
    %v237 = vmax.f32 %v226, 0.0
    %v238 = vmax.f32 %v229, 0.0
    %v239 = vmax.f32 %v232, 0.0
    %v240 = vmax.f32 %v235, 0.0
    %v241 = vld [vmem:[#allocation6] sm:$0xff]
    %v242 = vld [vmem:[#allocation6 + $0x8] sm:$0xff]
    %v243 = vld [vmem:[#allocation6 + $0x10] sm:$0xff]
    %v244 = vld [vmem:[#allocation6 + $0x18] sm:$0xff]
    %v245 = vld [vmem:[#allocation6 + $0x20] sm:$0xff]
    %v246 = vld [vmem:[#allocation6 + $0x28] sm:$0xff]
    %v247 = vld [vmem:[#allocation6 + $0x30] sm:$0xff]
    %v248 = vld [vmem:[#allocation6 + $0x38] sm:$0xff]
    %v249 = vld [vmem:[#allocation6 + $0x40] sm:$0xff]
    %v250 = vld [vmem:[#allocation6 + $0x48] sm:$0xff]
    %v251 = vld [vmem:[#allocation6 + $0x50] sm:$0xff]
    %v252 = vld [vmem:[#allocation6 + $0x58] sm:$0xff]
    %v253 = vld [vmem:[#allocation6 + $0x60] sm:$0xff]
    %v254 = vld [vmem:[#allocation6 + $0x68] sm:$0xff]
    %v255 = vld [vmem:[#allocation6 + $0x70] sm:$0xff]
    %v256 = vld [vmem:[#allocation6 + $0x78] sm:$0xff]
    %v257 = vld [vmem:[#allocation6 + $0x80] sm:$0xff]
    %v258 = vld [vmem:[#allocation6 + $0x88] sm:$0xff]
    %v259 = vld [vmem:[#allocation6 + $0x90] sm:$0xff]
    %v260 = vld [vmem:[#allocation6 + $0x98] sm:$0xff]
    %v261 = vld [vmem:[#allocation6 + $0xa0] sm:$0xff]
    %v262 = vld [vmem:[#allocation6 + $0xa8] sm:$0xff]
    %v263 = vld [vmem:[#allocation6 + $0xb0] sm:$0xff]
    %v264 = vld [vmem:[#allocation6 + $0xb8] sm:$0xff]
    %v265 = vld [vmem:[#allocation6 + $0xc0] sm:$0xff]
    %v266 = vld [vmem:[#allocation6 + $0xc8] sm:$0xff]
    %v267 = vld [vmem:[#allocation6 + $0xd0] sm:$0xff]
    %v268 = vld [vmem:[#allocation6 + $0xd8] sm:$0xff]
    %v269 = vld [vmem:[#allocation6 + $0xe0] sm:$0xff]
    %v270 = vld [vmem:[#allocation6 + $0xe8] sm:$0xff]
    %v271 = vld [vmem:[#allocation6 + $0xf0] sm:$0xff]
    %v272 = vld [vmem:[#allocation6 + $0xf8] sm:$0xff]
    %v273 = vld [vmem:[%s6] sm:$0x3]
    %v275 = vperm.slane %v273, 0
    %v276 = vperm.slane %v273, 1
    %279 = vmatpush.msra.mxu0 %v271
    %280 = vmatpush.msra.mxu0 %v269
    %281 = vmatpush.msra.mxu0 %v267
    %282 = vmatpush.msra.mxu0 %v265
    %283 = vmatpush.msra.mxu0 %v263
    %284 = vmatpush.msra.mxu0 %v261
    %285 = vmatpush.msra.mxu0 %v259
    %286 = vmatpush.msra.mxu0 %v257
    %287 = vmatpush.msra.mxu0 %v255
    %288 = vmatpush.msra.mxu0 %v253
    %289 = vmatpush.msra.mxu0 %v251
    %290 = vmatpush.msra.mxu0 %v249
    %291 = vmatpush.msra.mxu0 %v247
    %292 = vmatpush.msra.mxu0 %v245
    %293 = vmatpush.msra.mxu0 %v243
    %294 = vmatpush.msra.mxu0 %v241
    %295 = vmatmul.f32.gmra.mxu0 %v237
    %v296 = vpop.f32.mrf.mxu0
    %v297 = vadd.f32 %v275, %v296
    %298 = vmatmul.f32.gmra.mxu0 %v238
    %v299 = vpop.f32.mrf.mxu0
    %v300 = vadd.f32 %v275, %v299
    %301 = vmatmul.f32.gmra.mxu0 %v239
    %v302 = vpop.f32.mrf.mxu0
    %v303 = vadd.f32 %v275, %v302
    %304 = vmatmul.f32.gmra.mxu0 %v240
    %v305 = vpop.f32.mrf.mxu0
    %v306 = vadd.f32 %v275, %v305
    %307 = vdwg.mxu0
    %308 = vmatpush.msra.mxu0 %v272
    %309 = vmatpush.msra.mxu0 %v270
    %310 = vmatpush.msra.mxu0 %v268
    %311 = vmatpush.msra.mxu0 %v266
    %312 = vmatpush.msra.mxu0 %v264
    %313 = vmatpush.msra.mxu0 %v262
    %314 = vmatpush.msra.mxu0 %v260
    %315 = vmatpush.msra.mxu0 %v258
    %316 = vmatpush.msra.mxu0 %v256
    %317 = vmatpush.msra.mxu0 %v254
    %318 = vmatpush.msra.mxu0 %v252
    %319 = vmatpush.msra.mxu0 %v250
    %320 = vmatpush.msra.mxu0 %v248
    %321 = vmatpush.msra.mxu0 %v246
    %322 = vmatpush.msra.mxu0 %v244
    %323 = vmatpush.msra.mxu0 %v242
    %324 = vmatmul.f32.gmra.mxu0 %v237
    %v325 = vpop.f32.mrf.mxu0
    %v326 = vadd.f32 %v276, %v325
    %327 = vmatmul.f32.gmra.mxu0 %v238
    %v328 = vpop.f32.mrf.mxu0
    %v329 = vadd.f32 %v276, %v328
    %330 = vmatmul.f32.gmra.mxu0 %v239
    %v331 = vpop.f32.mrf.mxu0
    %v332 = vadd.f32 %v276, %v331
    %333 = vmatmul.f32.gmra.mxu0 %v240
    %v334 = vpop.f32.mrf.mxu0
    %v335 = vadd.f32 %v276, %v334
    %336 = vdwg.mxu0
    %v337 = vmax.f32 %v297, 0.0
    %v338 = vmax.f32 %v326, 0.0
    %v339 = vmax.f32 %v300, 0.0
    %v340 = vmax.f32 %v329, 0.0
    %v341 = vmax.f32 %v303, 0.0
    %v342 = vmax.f32 %v332, 0.0
    %v343 = vmax.f32 %v306, 0.0
    %v344 = vmax.f32 %v335, 0.0
    %v345 = vld [vmem:[#allocation2] sm:$0xf]
    %v346 = vmax.f32 %v337, %v339
    %v347 = vrot.slane %v346, 4
    %v348 = vmax.f32 %v346, %v347
    %v349 = vrot.slane %v348, 2
    %v350 = vmax.f32 %v348, %v349
    %v351 = vrot.slane %v350, 1
    %v352 = vmax.f32 %v350, %v351
    %v353 = vmax.f32 %v338, %v340
    %v354 = vrot.slane %v353, 4
    %v355 = vmax.f32 %v353, %v354
    %v356 = vrot.slane %v355, 2
    %v357 = vmax.f32 %v355, %v356
    %v358 = vrot.slane %v357, 1
    %v359 = vmax.f32 %v357, %v358
    %v360 = vmax.f32 %v341, %v343
    %v361 = vrot.slane %v360, 4
    %v362 = vmax.f32 %v360, %v361
    %v363 = vrot.slane %v362, 2
    %v364 = vmax.f32 %v362, %v363
    %v365 = vrot.slane %v364, 1
    %v366 = vmax.f32 %v364, %v365
    %v367 = vmax.f32 %v342, %v344
    %v368 = vrot.slane %v367, 4
    %v369 = vmax.f32 %v367, %v368
    %v370 = vrot.slane %v369, 2
    %v371 = vmax.f32 %v369, %v370
    %v372 = vrot.slane %v371, 1
    %v373 = vmax.f32 %v371, %v372
    %v378 = vrot.slane %v359, 6
    %v379 = vrot.slane %v373, 6
    %vm380 = vcmask 1041408
    %v381 = vsel %vm380, %v352, %v378
    %v382 = vsel %vm380, %v366, %v379
    %vm383 = vcmask 1044484
    %v384 = vsel %vm383, %v381, %v381
    %vm385 = vcmask 1046534
    %v386 = vsel %vm385, %v381, %v384
    %v387 = vrot.slane %v382, 7
    %vm388 = vcmask 1041409
    %v389 = vsel %vm388, %v387, %v386
    %vm390 = vcmask 1043459
    %v391 = vsel %vm390, %v387, %v389
    %vm392 = vcmask 1045509
    %v393 = vsel %vm392, %v387, %v391
    %vm394 = vcmask 1047559
    %v395 = vsel %vm394, %v387, %v393
    %v397 = vmax.f32 %v345, %v395
    %398 = vst [vmem:[#allocation2] sm:$0xf] %v397
    // Predicated region
    $region78: #{tpu_custom_call.1} parent=1 // pred_check
      %p399 = pneg %p123
    $region79: #{tpu_custom_call.1} parent=1 // pred_check_branch
      %401 = sbr.rel (%p399) target = $region81
    $region80: #{tpu_custom_call.1} parent=1 // pred_region
      %v402 = vld [vmem:[#allocation2] sm:$0xf]
      %v403 = vld [vmem:[#allocation8] sm:$0xff]
      %v404 = vld [vmem:[#allocation8 + $0x8] sm:$0xff]
      %v405 = vld [vmem:[#allocation8 + $0x10] sm:$0xff]
      %v406 = vld [vmem:[#allocation8 + $0x18] sm:$0xff]
      %v407 = vld [vmem:[#allocation8 + $0x20] sm:$0xff]
      %v408 = vld [vmem:[#allocation8 + $0x28] sm:$0xff]
      %v409 = vld [vmem:[#allocation8 + $0x30] sm:$0xff]
      %v410 = vld [vmem:[#allocation8 + $0x38] sm:$0xff]
      %v411 = vld [vmem:[#allocation8 + $0x40] sm:$0xff]
      %v412 = vld [vmem:[#allocation8 + $0x48] sm:$0xff]
      %v413 = vld [vmem:[#allocation8 + $0x50] sm:$0xff]
      %v414 = vld [vmem:[#allocation8 + $0x58] sm:$0xff]
      %v415 = vld [vmem:[#allocation8 + $0x60] sm:$0xff]
      %v416 = vld [vmem:[#allocation8 + $0x68] sm:$0xff]
      %v417 = vld [vmem:[#allocation8 + $0x70] sm:$0xff]
      %v418 = vld [vmem:[#allocation8 + $0x78] sm:$0xff]
      %v419 = vld [vmem:[#allocation8 + $0x80] sm:$0xff]
      %v420 = vld [vmem:[#allocation8 + $0x88] sm:$0xff]
      %v421 = vld [vmem:[#allocation8 + $0x90] sm:$0xff]
      %v422 = vld [vmem:[#allocation8 + $0x98] sm:$0xff]
      %v423 = vld [vmem:[#allocation8 + $0xa0] sm:$0xff]
      %v424 = vld [vmem:[#allocation8 + $0xa8] sm:$0xff]
      %v425 = vld [vmem:[#allocation8 + $0xb0] sm:$0xff]
      %v426 = vld [vmem:[#allocation8 + $0xb8] sm:$0xff]
      %v427 = vld [vmem:[#allocation8 + $0xc0] sm:$0xff]
      %v428 = vld [vmem:[#allocation8 + $0xc8] sm:$0xff]
      %v429 = vld [vmem:[#allocation8 + $0xd0] sm:$0xff]
      %v430 = vld [vmem:[#allocation8 + $0xd8] sm:$0xff]
      %v431 = vld [vmem:[#allocation8 + $0xe0] sm:$0xff]
      %v432 = vld [vmem:[#allocation8 + $0xe8] sm:$0xff]
      %v433 = vld [vmem:[#allocation8 + $0xf0] sm:$0xff]
      %v434 = vld [vmem:[#allocation8 + $0xf8] sm:$0xff]
      %v435 = vld [vmem:[#allocation8 + $0x100] sm:$0xff]
      %v436 = vld [vmem:[#allocation8 + $0x108] sm:$0xff]
      %v437 = vld [vmem:[#allocation8 + $0x110] sm:$0xff]
      %v438 = vld [vmem:[#allocation8 + $0x118] sm:$0xff]
      %v439 = vld [vmem:[#allocation8 + $0x120] sm:$0xff]
      %v440 = vld [vmem:[#allocation8 + $0x128] sm:$0xff]
      %v441 = vld [vmem:[#allocation8 + $0x130] sm:$0xff]
      %v442 = vld [vmem:[#allocation8 + $0x138] sm:$0xff]
      %v443 = vld [vmem:[#allocation8 + $0x140] sm:$0xff]
      %v444 = vld [vmem:[#allocation8 + $0x148] sm:$0xff]
      %v445 = vld [vmem:[#allocation8 + $0x150] sm:$0xff]
      %v446 = vld [vmem:[#allocation8 + $0x158] sm:$0xff]
      %v447 = vld [vmem:[#allocation8 + $0x160] sm:$0xff]
      %v448 = vld [vmem:[#allocation8 + $0x168] sm:$0xff]
      %v449 = vld [vmem:[#allocation8 + $0x170] sm:$0xff]
      %v450 = vld [vmem:[#allocation8 + $0x178] sm:$0xff]
      %v451 = vld [vmem:[#allocation8 + $0x180] sm:$0xff]
      %v452 = vld [vmem:[#allocation8 + $0x188] sm:$0xff]
      %v453 = vld [vmem:[#allocation8 + $0x190] sm:$0xff]
      %v454 = vld [vmem:[#allocation8 + $0x198] sm:$0xff]
      %v455 = vld [vmem:[#allocation8 + $0x1a0] sm:$0xff]
      %v456 = vld [vmem:[#allocation8 + $0x1a8] sm:$0xff]
      %v457 = vld [vmem:[#allocation8 + $0x1b0] sm:$0xff]
      %v458 = vld [vmem:[#allocation8 + $0x1b8] sm:$0xff]
      %v459 = vld [vmem:[#allocation8 + $0x1c0] sm:$0xff]
      %v460 = vld [vmem:[#allocation8 + $0x1c8] sm:$0xff]
      %v461 = vld [vmem:[#allocation8 + $0x1d0] sm:$0xff]
      %v462 = vld [vmem:[#allocation8 + $0x1d8] sm:$0xff]
      %v463 = vld [vmem:[#allocation8 + $0x1e0] sm:$0xff]
      %v464 = vld [vmem:[#allocation8 + $0x1e8] sm:$0xff]
      %v465 = vld [vmem:[#allocation8 + $0x1f0] sm:$0xff]
      %v466 = vld [vmem:[#allocation8 + $0x1f8] sm:$0xff]
      %v467 = vld [vmem:[%s8] sm:$0x3]
      %v469 = vperm.slane %v467, 0
      %v470 = vperm.slane %v467, 1
      %474 = vst [vmem:[#allocation1] ss:$4 sm:$0xff] %v402
      %v475 = vld.sshfl [vmem:[#allocation1] sm:$0xff pattern:$0x73625140]
      %v476 = vld.sshfl [vmem:[#allocation1 + $0x8] sm:$0xff pattern:$0x73625140]
      %479 = vmatpush.msra.mxu0 %v433
      %480 = vmatpush.msra.mxu0 %v431
      %481 = vmatpush.msra.mxu0 %v429
      %482 = vmatpush.msra.mxu0 %v427
      %483 = vmatpush.msra.mxu0 %v425
      %484 = vmatpush.msra.mxu0 %v423
      %485 = vmatpush.msra.mxu0 %v421
      %486 = vmatpush.msra.mxu0 %v419
      %487 = vmatpush.msra.mxu0 %v417
      %488 = vmatpush.msra.mxu0 %v415
      %489 = vmatpush.msra.mxu0 %v413
      %490 = vmatpush.msra.mxu0 %v411
      %491 = vmatpush.msra.mxu0 %v409
      %492 = vmatpush.msra.mxu0 %v407
      %493 = vmatpush.msra.mxu0 %v405
      %494 = vmatpush.msra.mxu0 %v403
      %495 = vmatmul.f32.gmra.mxu0 %v475
      %v496 = vpop.f32.mrf.mxu0
      %v497 = vadd.f32 %v469, %v496
      %498 = vdwg.mxu0
      %499 = vmatpush.msra.mxu0 %v465
      %500 = vmatpush.msra.mxu0 %v463
      %501 = vmatpush.msra.mxu0 %v461
      %502 = vmatpush.msra.mxu0 %v459
      %503 = vmatpush.msra.mxu0 %v457
      %504 = vmatpush.msra.mxu0 %v455
      %505 = vmatpush.msra.mxu0 %v453
      %506 = vmatpush.msra.mxu0 %v451
      %507 = vmatpush.msra.mxu0 %v449
      %508 = vmatpush.msra.mxu0 %v447
      %509 = vmatpush.msra.mxu0 %v445
      %510 = vmatpush.msra.mxu0 %v443
      %511 = vmatpush.msra.mxu0 %v441
      %512 = vmatpush.msra.mxu0 %v439
      %513 = vmatpush.msra.mxu0 %v437
      %514 = vmatpush.msra.mxu0 %v435
      %515 = vmatmul.f32.gmra.mxu0 %v476
      %v516 = vpop.f32.mrf.mxu0
      %v517 = vadd.f32 %v497, %v516
      %518 = vdwg.mxu0
      %519 = vmatpush.msra.mxu0 %v434
      %520 = vmatpush.msra.mxu0 %v432
      %521 = vmatpush.msra.mxu0 %v430
      %522 = vmatpush.msra.mxu0 %v428
      %523 = vmatpush.msra.mxu0 %v426
      %524 = vmatpush.msra.mxu0 %v424
      %525 = vmatpush.msra.mxu0 %v422
      %526 = vmatpush.msra.mxu0 %v420
      %527 = vmatpush.msra.mxu0 %v418
      %528 = vmatpush.msra.mxu0 %v416
      %529 = vmatpush.msra.mxu0 %v414
      %530 = vmatpush.msra.mxu0 %v412
      %531 = vmatpush.msra.mxu0 %v410
      %532 = vmatpush.msra.mxu0 %v408
      %533 = vmatpush.msra.mxu0 %v406
      %534 = vmatpush.msra.mxu0 %v404
      %535 = vmatmul.f32.gmra.mxu0 %v475
      %v536 = vpop.f32.mrf.mxu0
      %v537 = vadd.f32 %v470, %v536
      %538 = vdwg.mxu0
      %539 = vmatpush.msra.mxu0 %v466
      %540 = vmatpush.msra.mxu0 %v464
      %541 = vmatpush.msra.mxu0 %v462
      %542 = vmatpush.msra.mxu0 %v460
      %543 = vmatpush.msra.mxu0 %v458
      %544 = vmatpush.msra.mxu0 %v456
      %545 = vmatpush.msra.mxu0 %v454
      %546 = vmatpush.msra.mxu0 %v452
      %547 = vmatpush.msra.mxu0 %v450
      %548 = vmatpush.msra.mxu0 %v448
      %549 = vmatpush.msra.mxu0 %v446
      %550 = vmatpush.msra.mxu0 %v444
      %551 = vmatpush.msra.mxu0 %v442
      %552 = vmatpush.msra.mxu0 %v440
      %553 = vmatpush.msra.mxu0 %v438
      %554 = vmatpush.msra.mxu0 %v436
      %555 = vmatmul.f32.gmra.mxu0 %v476
      %v556 = vpop.f32.mrf.mxu0
      %v557 = vadd.f32 %v537, %v556
      %558 = vdwg.mxu0
      %v559 = vmax.f32 %v517, 0.0
      %v560 = vmax.f32 %v557, 0.0
      %v561 = vld [vmem:[#allocation9] sm:$0xff]
      %v562 = vld [vmem:[#allocation9 + $0x8] sm:$0xff]
      %v563 = vld [vmem:[#allocation9 + $0x10] sm:$0xff]
      %v564 = vld [vmem:[#allocation9 + $0x18] sm:$0xff]
      %v565 = vld [vmem:[#allocation9 + $0x20] sm:$0xff]
      %v566 = vld [vmem:[#allocation9 + $0x28] sm:$0xff]
      %v567 = vld [vmem:[#allocation9 + $0x30] sm:$0xff]
      %v568 = vld [vmem:[#allocation9 + $0x38] sm:$0xff]
      %v569 = vld [vmem:[#allocation9 + $0x40] sm:$0xff]
      %v570 = vld [vmem:[#allocation9 + $0x48] sm:$0xff]
      %v571 = vld [vmem:[#allocation9 + $0x50] sm:$0xff]
      %v572 = vld [vmem:[#allocation9 + $0x58] sm:$0xff]
      %v573 = vld [vmem:[#allocation9 + $0x60] sm:$0xff]
      %v574 = vld [vmem:[#allocation9 + $0x68] sm:$0xff]
      %v575 = vld [vmem:[#allocation9 + $0x70] sm:$0xff]
      %v576 = vld [vmem:[#allocation9 + $0x78] sm:$0xff]
      %v577 = vld [vmem:[#allocation9 + $0x80] sm:$0xff]
      %v578 = vld [vmem:[#allocation9 + $0x88] sm:$0xff]
      %v579 = vld [vmem:[#allocation9 + $0x90] sm:$0xff]
      %v580 = vld [vmem:[#allocation9 + $0x98] sm:$0xff]
      %v581 = vld [vmem:[#allocation9 + $0xa0] sm:$0xff]
      %v582 = vld [vmem:[#allocation9 + $0xa8] sm:$0xff]
      %v583 = vld [vmem:[#allocation9 + $0xb0] sm:$0xff]
      %v584 = vld [vmem:[#allocation9 + $0xb8] sm:$0xff]
      %v585 = vld [vmem:[#allocation9 + $0xc0] sm:$0xff]
      %v586 = vld [vmem:[#allocation9 + $0xc8] sm:$0xff]
      %v587 = vld [vmem:[#allocation9 + $0xd0] sm:$0xff]
      %v588 = vld [vmem:[#allocation9 + $0xd8] sm:$0xff]
      %v589 = vld [vmem:[#allocation9 + $0xe0] sm:$0xff]
      %v590 = vld [vmem:[#allocation9 + $0xe8] sm:$0xff]
      %v591 = vld [vmem:[#allocation9 + $0xf0] sm:$0xff]
      %v592 = vld [vmem:[#allocation9 + $0xf8] sm:$0xff]
      %v593 = vld [vmem:[%s10] sm:$0x1]
      %v595 = vperm.slane %v593, 0
      %597 = vmatpush.msra.mxu0 %v576
      %598 = vmatpush.msra.mxu0 %v575
      %599 = vmatpush.msra.mxu0 %v574
      %600 = vmatpush.msra.mxu0 %v573
      %601 = vmatpush.msra.mxu0 %v572
      %602 = vmatpush.msra.mxu0 %v571
      %603 = vmatpush.msra.mxu0 %v570
      %604 = vmatpush.msra.mxu0 %v569
      %605 = vmatpush.msra.mxu0 %v568
      %606 = vmatpush.msra.mxu0 %v567
      %607 = vmatpush.msra.mxu0 %v566
      %608 = vmatpush.msra.mxu0 %v565
      %609 = vmatpush.msra.mxu0 %v564
      %610 = vmatpush.msra.mxu0 %v563
      %611 = vmatpush.msra.mxu0 %v562
      %612 = vmatpush.msra.mxu0 %v561
      %613 = vmatmul.f32.gmra.mxu0 %v559
      %v614 = vpop.f32.mrf.mxu0
      %v615 = vadd.f32 %v595, %v614
      %616 = vdwg.mxu0
      %617 = vmatpush.msra.mxu0 %v592
      %618 = vmatpush.msra.mxu0 %v591
      %619 = vmatpush.msra.mxu0 %v590
      %620 = vmatpush.msra.mxu0 %v589
      %621 = vmatpush.msra.mxu0 %v588
      %622 = vmatpush.msra.mxu0 %v587
      %623 = vmatpush.msra.mxu0 %v586
      %624 = vmatpush.msra.mxu0 %v585
      %625 = vmatpush.msra.mxu0 %v584
      %626 = vmatpush.msra.mxu0 %v583
      %627 = vmatpush.msra.mxu0 %v582
      %628 = vmatpush.msra.mxu0 %v581
      %629 = vmatpush.msra.mxu0 %v580
      %630 = vmatpush.msra.mxu0 %v579
      %631 = vmatpush.msra.mxu0 %v578
      %632 = vmatpush.msra.mxu0 %v577
      %633 = vmatmul.f32.gmra.mxu0 %v560
      %v634 = vpop.f32.mrf.mxu0
      %v635 = vadd.f32 %v615, %v634
      %636 = vdwg.mxu0
      %v637 = vmax.f32 %v635, 0.0
      %v638 = vld [vmem:[#allocation11] sm:$0xff]
      %v639 = vld [vmem:[#allocation11 + $0x8] sm:$0xff]
      %v640 = vld [vmem:[#allocation11 + $0x10] sm:$0xff]
      %v641 = vld [vmem:[#allocation11 + $0x18] sm:$0xff]
      %v642 = vld [vmem:[#allocation11 + $0x20] sm:$0xff]
      %v643 = vld [vmem:[#allocation11 + $0x28] sm:$0xff]
      %v644 = vld [vmem:[#allocation11 + $0x30] sm:$0xff]
      %v645 = vld [vmem:[#allocation11 + $0x38] sm:$0xff]
      %v646 = vld [vmem:[#allocation11 + $0x40] sm:$0xff]
      %v647 = vld [vmem:[#allocation11 + $0x48] sm:$0xff]
      %v648 = vld [vmem:[#allocation11 + $0x50] sm:$0xff]
      %v649 = vld [vmem:[#allocation11 + $0x58] sm:$0xff]
      %v650 = vld [vmem:[#allocation11 + $0x60] sm:$0xff]
      %v651 = vld [vmem:[#allocation11 + $0x68] sm:$0xff]
      %v652 = vld [vmem:[#allocation11 + $0x70] sm:$0xff]
      %v653 = vld [vmem:[#allocation11 + $0x78] sm:$0xff]
      %v654 = vld [vmem:[%s12] sm:$0x1]
      %v656 = vperm.slane %v654, 0
      %658 = vmatpush.msra.mxu0 %v653
      %659 = vmatpush.msra.mxu0 %v652
      %660 = vmatpush.msra.mxu0 %v651
      %661 = vmatpush.msra.mxu0 %v650
      %662 = vmatpush.msra.mxu0 %v649
      %663 = vmatpush.msra.mxu0 %v648
      %664 = vmatpush.msra.mxu0 %v647
      %665 = vmatpush.msra.mxu0 %v646
      %666 = vmatpush.msra.mxu0 %v645
      %667 = vmatpush.msra.mxu0 %v644
      %668 = vmatpush.msra.mxu0 %v643
      %669 = vmatpush.msra.mxu0 %v642
      %670 = vmatpush.msra.mxu0 %v641
      %671 = vmatpush.msra.mxu0 %v640
      %672 = vmatpush.msra.mxu0 %v639
      %673 = vmatpush.msra.mxu0 %v638
      %674 = vmatmul.f32.gmra.mxu0 %v637
      %v675 = vpop.f32.mrf.mxu0
      %v676 = vadd.f32 %v656, %v675
      %677 = vdwg.mxu0
      %678 = vst [vmem:[#allocation12] sm:$0x3] %v676
    $region81: #{tpu_custom_call.1} parent=1 // pred_fallthru
      _
    // Predicated region
    $region82: #{tpu_custom_call.1} parent=1 // pred_check
      _
    $region83: #{tpu_custom_call.1} parent=1 // pred_check_branch
      %680 = sbr.rel (0) target = $region85
    $region84: #{tpu_custom_call.1} parent=1 // pred_region
      %682 = vsyncadd [#allocation5], 0
      %s684 = sshll.u32 [#allocation12], 4
      %s685 = int_to_ptr.vmem [resolvable:$true] %s684
      %s686 = sshll.u32 %s13, 4
      %s687 = int_to_ptr.hbm [resolvable:$true] %s686
      %689 = dma.vmem_to_hbm [thread:$0]  %s685, 32, %s687, [#allocation5]
    $region85: #{tpu_custom_call.1} parent=1 // pred_fallthru
      _
    // Predicated region
    $region86: #{tpu_custom_call.1} parent=1 // pred_check
      _
    $region87: #{tpu_custom_call.1} parent=1 // pred_check_branch
      %691 = sbr.rel (0) target = $region89
    $region88: #{tpu_custom_call.1} parent=1 // pred_region
      %693 = dma.done [#allocation5], 32
    $region89: #{tpu_custom_call.1} parent=1 // pred_fallthru
      _
    %694 = vsyncpa [#allocation4], 1
    %695 = vsyncpa [#allocation7], 1
    %696 = vsyncpa [#allocation10], 1
    %697 = vsyncpa [#allocation5], 1

</llo_original>
